<compile_context>
chip_gen: v7x
topology: tpu7x:2x2x1
jax: 0.10.0
libtpu: 0.0.40
codegen_flags: <defaults>
</compile_context>

<pallas_src>
import jax
import jax.numpy as jnp
from jax.experimental import pallas as pl
from jax.experimental.pallas import tpu as pltpu


# --------------------------------------------------------------------------
# Kernels
# --------------------------------------------------------------------------
def _layer1_kernel(adj_ref, x_ref, w1_ref, w2_ref, s2_ref):
    """Per row-tile: s2 = relu((adj_tile @ x) @ W1) @ W2."""
    ax = jnp.dot(adj_ref[...], x_ref[...],
                 preferred_element_type=jnp.float32)               # [tm, fi]
    h1 = jnp.maximum(
        jnp.dot(ax.astype(jnp.bfloat16), w1_ref[...],
                preferred_element_type=jnp.float32), 0.0)          # [tm, f1]
    s2 = jnp.dot(h1.astype(jnp.bfloat16), w2_ref[...],
                 preferred_element_type=jnp.float32)               # [tm, f2]
    s2_ref[...] = s2.astype(s2_ref.dtype)


def _layer2_kernel(adj_ref, s2_ref, wz_ref, bz_ref, h2_ref, z_ref):
    """Per row-tile: h2 = relu(adj_tile @ S2);  z = h2 @ Wz + bz."""
    h2 = jnp.maximum(
        jnp.dot(adj_ref[...], s2_ref[...],
                preferred_element_type=jnp.float32), 0.0)          # [tm, f2]
    h2_ref[...] = h2.astype(h2_ref.dtype)
    z = jnp.dot(h2.astype(jnp.bfloat16), wz_ref[...],
                preferred_element_type=jnp.float32) + bz_ref[...]
    z_ref[...] = z.astype(z_ref.dtype)


# --------------------------------------------------------------------------
# Tiling helpers
# --------------------------------------------------------------------------
def _round_up(v, m):
    return (v + m - 1) // m * m


def _default_row_tile():
    """512-row tiles on v6e (128 MiB VMEM, measured roofline gain); 256
    elsewhere (v7x has only 64 MiB VMEM, v5e is the most VMEM-constrained)."""
    try:
        kind = jax.devices()[0].device_kind.lower()
    except Exception:
        return 256
    if "v6" in kind:
        return 512
    return 256


def _choose_row_tiling(n_rows, row_tile):
    """Pick (tm, padded_rows).

    * Small graphs (N <= row_tile): split into 2 grid steps so both v7x
      TensorCores get work; padding bounded by the tile rounding (16).
    * Large graphs: pad rows to a multiple of 128 only (<=128 extra rows,
      not round_up(N, tm)) and pick tm in {row_tile, row_tile/2, ..., 128}
      that divides the padded extent.
    """
    if n_rows <= row_tile:
        if n_rows >= 16:
            tm = _round_up((n_rows + 1) // 2, 16)
        else:
            tm = _round_up(n_rows, 16)
        return tm, _round_up(n_rows, tm)
    np_rows = _round_up(n_rows, 128)
    tm = row_tile
    while tm > 128 and np_rows % tm:
        tm //= 2
    if np_rows % tm:
        tm = 128
    return tm, np_rows


# --------------------------------------------------------------------------
# Forward factory (pads call-invariant arrays once, returns jitted forward)
# --------------------------------------------------------------------------
def make_brgcl_forward(adj, w1, w2, wz, bz, *, row_tile=None):
    """adj: [N, N], w1: [n_input, n_enc_1], w2: [n_enc_1, n_enc_2],
    wz: [n_enc_2, n_z] (= Wz^T of nn.Linear), bz: [1, n_z].

    Pads / bf16-casts everything that is static across calls (adj is the big
    one) exactly once, then returns forward(x) -> (h2 [N, n_enc_2],
    z [N, n_z]) in float32.
    """
    N = adj.shape[0]
    n_input, n_enc_1 = w1.shape
    n_enc_2 = w2.shape[1]
    n_z = wz.shape[1]
    if row_tile is None:
        row_tile = _default_row_tile()

    tm, Np = _choose_row_tiling(N, row_tile)
    # Lane padding: every feature dim to a multiple of 128 (lane-dense vst).
    fi = _round_up(n_input, 128)
    f1 = _round_up(n_enc_1, 128)
    f2 = _round_up(n_enc_2, 128)
    fz = _round_up(n_z, 128)

    bf = jnp.bfloat16
    # ---- One-time padding / casting (hoisted out of the per-call path) ----
    adj_p = jnp.zeros((Np, Np), bf).at[:N, :N].set(adj.astype(bf))
    w1_p = jnp.zeros((fi, f1), bf).at[:n_input, :n_enc_1].set(w1.astype(bf))
    w2_p = jnp.zeros((f1, f2), bf).at[:n_enc_1, :n_enc_2].set(w2.astype(bf))
    wz_p = jnp.zeros((f2, fz), bf).at[:n_enc_2, :n_z].set(wz.astype(bf))
    bz_p = jnp.zeros((1, fz), jnp.float32).at[:, :n_z].set(
        bz.astype(jnp.float32))

    grid = (Np // tm,)
    # Constant-index blocks never change across grid steps -> 1 buffer.
    resident = dict(pipeline_mode=pl.Buffered(1))

    # ---- Explicit VMEM budgets (buffers + f32 intermediates + headroom) ----
    bytes1 = (2 * tm * Np * 2                  # adj row tile, double-buffered
              + Np * fi * 2                    # x, resident (1 buffer)
              + fi * f1 * 2 + f1 * f2 * 2      # W1, W2
              + 2 * tm * f2 * 2                # s2 out, double-buffered
              + tm * (fi + f1 + f2) * 4)       # f32 intermediates in-kernel
    bytes2 = (2 * tm * Np * 2                  # adj row tile
              + Np * f2 * 2                    # S2, resident
              + f2 * fz * 2 + fz * 4           # Wz, bz
              + 2 * tm * (f2 + fz) * 4         # h2/z outs, double-buffered
              + tm * (f2 + fz) * 4)            # f32 intermediates
    vmem1 = min(int(bytes1 * 1.25) + (2 << 20), 64 << 20)
    vmem2 = min(int(bytes2 * 1.25) + (2 << 20), 64 << 20)

    cp1 = pltpu.CompilerParams(dimension_semantics=("parallel",),
                               vmem_limit_bytes=vmem1)
    cp2 = pltpu.CompilerParams(dimension_semantics=("parallel",),
                               vmem_limit_bytes=vmem2)

    # ---- Kernel 1: S2 = relu((adj @ x) @ W1) @ W2, row-tiled over adj -----
    layer1 = pl.pallas_call(
        _layer1_kernel,
        out_shape=jax.ShapeDtypeStruct((Np, f2), bf),
        grid=grid,
        in_specs=[
            pl.BlockSpec((tm, Np), lambda i: (i, 0)),               # adj rows
            pl.BlockSpec((Np, fi), lambda i: (0, 0), **resident),   # x
            pl.BlockSpec((fi, f1), lambda i: (0, 0), **resident),   # W1
            pl.BlockSpec((f1, f2), lambda i: (0, 0), **resident),   # W2
        ],
        out_specs=pl.BlockSpec((tm, f2), lambda i: (i, 0)),
        compiler_params=cp1,
    )

    # ---- Kernel 2: h2 = relu(adj @ S2); z = h2 @ Wz + bz -------------------
    layer2 = pl.pallas_call(
        _layer2_kernel,
        out_shape=(jax.ShapeDtypeStruct((Np, f2), jnp.float32),
                   jax.ShapeDtypeStruct((Np, fz), jnp.float32)),
        grid=grid,
        in_specs=[
            pl.BlockSpec((tm, Np), lambda i: (i, 0)),               # adj rows
            pl.BlockSpec((Np, f2), lambda i: (0, 0), **resident),   # S2
            pl.BlockSpec((f2, fz), lambda i: (0, 0), **resident),   # Wz
            pl.BlockSpec((1, fz), lambda i: (0, 0), **resident),    # bz
        ],
        out_specs=(pl.BlockSpec((tm, f2), lambda i: (i, 0)),
                   pl.BlockSpec((tm, fz), lambda i: (i, 0))),
        compiler_params=cp2,
    )

    def _fwd(x, adj_p, w1_p, w2_p, wz_p, bz_p):
        x_p = jnp.zeros((Np, fi), bf).at[:N, :n_input].set(x.astype(bf))
        s2 = layer1(adj_p, x_p, w1_p, w2_p)
        h2_p, z_p = layer2(adj_p, s2, wz_p, bz_p)
        return h2_p[:N, :n_enc_2], z_p[:N, :n_z]

    fwd_jit = jax.jit(_fwd)

    def forward(x):
        assert x.shape == (N, n_input), (x.shape, (N, n_input))
        return fwd_jit(x, adj_p, w1_p, w2_p, wz_p, bz_p)

    return forward


def brgcl_forward(x, adj, w1, w2, wz, bz, *, row_tile=None):
    """One-shot convenience wrapper.  For repeated calls with the same graph
    use make_brgcl_forward() so the adj pad/cast is done only once."""
    return make_brgcl_forward(adj, w1, w2, wz, bz, row_tile=row_tile)(x)


# --------------------------------------------------------------------------
# Demo / correctness check
# --------------------------------------------------------------------------
def _xavier_uniform(key, fan_in, fan_out):
    limit = jnp.sqrt(6.0 / (fan_in + fan_out))
    return jax.random.uniform(key, (fan_in, fan_out), jnp.float32, -limit, limit)


if __name__ == "__main__":
    # Small shapes consistent with the module's forward.
    N = 64          # number of graph nodes
    n_input = 32
    n_enc_1 = 64
    n_enc_2 = 32
    n_z = 16

    key = jax.random.PRNGKey(0)
    kx, kadj, k1, k2, kz, kb = jax.random.split(key, 6)

    x = jax.random.normal(kx, (N, n_input), jnp.float32)

    # Symmetric, row-normalized dense adjacency (with self-loops).
    a = (jax.random.uniform(kadj, (N, N)) < 0.1).astype(jnp.float32)
    a = jnp.maximum(a, a.T) + jnp.eye(N, dtype=jnp.float32)
    adj = a / jnp.sum(a, axis=1, keepdims=True)

    # Deterministic parameter init (stand-in for the pretrained state dict).
    w1 = _xavier_uniform(k1, n_input, n_enc_1)
    w2 = _xavier_uniform(k2, n_enc_1, n_enc_2)
    wz = _xavier_uniform(kz, n_enc_2, n_z)          # already [in, out] = Wz^T
    bz = jax.random.uniform(kb, (1, n_z), jnp.float32, -0.1, 0.1)

    # Build once (pads + casts adj once), call repeatedly.
    fwd = make_brgcl_forward(adj, w1, w2, wz, bz)
    h2, z = fwd(x)
    h2, z = fwd(x)          # second call: no re-padding, cached executable
    jax.block_until_ready((h2, z))

    # Reference in plain JAX (f32). bf16 MXU inputs => loose tolerance.
    h1_ref = jnp.maximum(adj @ (x @ w1), 0.0)
    h2_ref = jnp.maximum(adj @ (h1_ref @ w2), 0.0)
    z_ref = h2_ref @ wz + bz

    assert h2.shape == (N, n_enc_2) and z.shape == (N, n_z)
    assert float(jnp.max(jnp.abs(h2 - h2_ref))) < 5e-2, "h2 mismatch"
    assert float(jnp.max(jnp.abs(z - z_ref))) < 5e-2, "z mismatch"

    print("KERNEL_OK")
</pallas_src>

<mosaic_0001>
module attributes {stable_mosaic.version = 11 : i64} {
  func.func @_layer2_kernel(%arg0: i32, %arg1: memref<32x64xbf16, #tpu.memory_space<vmem>>, %arg2: memref<64x128xbf16, #tpu.memory_space<vmem>>, %arg3: memref<128x128xbf16, #tpu.memory_space<vmem>>, %arg4: memref<1x128xf32, #tpu.memory_space<vmem>>, %arg5: memref<32x128xf32, #tpu.memory_space<vmem>>, %arg6: memref<32x128xf32, #tpu.memory_space<vmem>>) attributes {dimension_semantics = [#tpu.dimension_semantics<parallel>], iteration_bounds = array<i64: 2>, scalar_prefetch = 0 : i64, scratch_operands = 0 : i64, tpu.core_type = #tpu.core_type<tc>, window_params = [{transform_indices = @transform_0, window_bounds = array<i64: 32, 64>}, {pipeline_mode = #tpu.pipeline_mode<synchronous>, transform_indices = @transform_1, window_bounds = array<i64: 64, 128>}, {pipeline_mode = #tpu.pipeline_mode<synchronous>, transform_indices = @transform_2, window_bounds = array<i64: 128, 128>}, {pipeline_mode = #tpu.pipeline_mode<synchronous>, transform_indices = @transform_3, window_bounds = array<i64: 1, 128>}, {transform_indices = @transform_4, window_bounds = array<i64: 32, 128>}, {transform_indices = @transform_5, window_bounds = array<i64: 32, 128>}]} {
    %c0 = arith.constant 0 : index
    %c0_0 = arith.constant 0 : index
    %0 = vector.load %arg1[%c0, %c0_0] : memref<32x64xbf16, #tpu.memory_space<vmem>>, vector<32x64xbf16>
    %c0_1 = arith.constant 0 : index
    %c0_2 = arith.constant 0 : index
    %1 = vector.load %arg2[%c0_1, %c0_2] : memref<64x128xbf16, #tpu.memory_space<vmem>>, vector<64x128xbf16>
    %cst = arith.constant dense<0.000000e+00> : vector<32x128xf32>
    %2 = tpu.matmul %0, %1, %cst {dimension_numbers = #tpu.dot_dimension_numbers<[1], [0], [0], [1], [0, 0, 1, 1], [], []>} : vector<32x64xbf16>, vector<64x128xbf16>, vector<32x128xf32> -> vector<32x128xf32>
    %cst_3 = arith.constant 0.000000e+00 : f32
    %3 = vector.broadcast %cst_3 : f32 to vector<32x128xf32>
    %4 = arith.maximumf %2, %3 : vector<32x128xf32>
    %c0_4 = arith.constant 0 : index
    %c0_5 = arith.constant 0 : index
    %5 = vector.load %arg5[%c0_4, %c0_5] : memref<32x128xf32, #tpu.memory_space<vmem>>, vector<32x128xf32>
    tpu.vector_store %arg5[%c0_4, %c0_5], %4 {strides = array<i32>} : memref<32x128xf32, #tpu.memory_space<vmem>>, vector<32x128xf32>,
    %6 = arith.truncf %4 : vector<32x128xf32> to vector<32x128xbf16>
    %c0_6 = arith.constant 0 : index
    %c0_7 = arith.constant 0 : index
    %7 = vector.load %arg3[%c0_6, %c0_7] : memref<128x128xbf16, #tpu.memory_space<vmem>>, vector<128x128xbf16>
    %cst_8 = arith.constant dense<0.000000e+00> : vector<32x128xf32>
    %8 = tpu.matmul %6, %7, %cst_8 {dimension_numbers = #tpu.dot_dimension_numbers<[1], [0], [0], [1], [0, 0, 1, 1], [], []>} : vector<32x128xbf16>, vector<128x128xbf16>, vector<32x128xf32> -> vector<32x128xf32>
    %c0_9 = arith.constant 0 : index
    %c0_10 = arith.constant 0 : index
    %9 = vector.load %arg4[%c0_9, %c0_10] : memref<1x128xf32, #tpu.memory_space<vmem>>, vector<1x128xf32>
    %10 = vector.broadcast %9 : vector<1x128xf32> to vector<32x128xf32>
    %11 = arith.addf %8, %10 : vector<32x128xf32>
    %c0_11 = arith.constant 0 : index
    %c0_12 = arith.constant 0 : index
    %12 = vector.load %arg6[%c0_11, %c0_12] : memref<32x128xf32, #tpu.memory_space<vmem>>, vector<32x128xf32>
    tpu.vector_store %arg6[%c0_11, %c0_12], %11 {strides = array<i32>} : memref<32x128xf32, #tpu.memory_space<vmem>>, vector<32x128xf32>,
    return
  }
  func.func @transform_0(%arg0: i32) -> (i32, i32) {
    %c0_i32 = arith.constant 0 : i32
    %c0_i32_0 = arith.constant 0 : i32
    return %arg0, %c0_i32 : i32, i32
  }
  func.func @transform_1(%arg0: i32) -> (i32, i32) {
    %c0_i32 = arith.constant 0 : i32
    %c0_i32_0 = arith.constant 0 : i32
    %c0_i32_1 = arith.constant 0 : i32
    return %c0_i32, %c0_i32_0 : i32, i32
  }
  func.func @transform_2(%arg0: i32) -> (i32, i32) {
    %c0_i32 = arith.constant 0 : i32
    %c0_i32_0 = arith.constant 0 : i32
    %c0_i32_1 = arith.constant 0 : i32
    return %c0_i32, %c0_i32_0 : i32, i32
  }
  func.func @transform_3(%arg0: i32) -> (i32, i32) {
    %c0_i32 = arith.constant 0 : i32
    %c0_i32_0 = arith.constant 0 : i32
    %c0_i32_1 = arith.constant 0 : i32
    return %c0_i32, %c0_i32_0 : i32, i32
  }
  func.func @transform_4(%arg0: i32) -> (i32, i32) {
    %c0_i32 = arith.constant 0 : i32
    %c0_i32_0 = arith.constant 0 : i32
    return %arg0, %c0_i32 : i32, i32
  }
  func.func @transform_5(%arg0: i32) -> (i32, i32) {
    %c0_i32 = arith.constant 0 : i32
    %c0_i32_0 = arith.constant 0 : i32
    return %arg0, %c0_i32 : i32, i32
  }
}

module attributes {stable_mosaic.version = 11 : i64} {
  func.func @_layer1_kernel(%arg0: i32, %arg1: memref<32x64xbf16, #tpu.memory_space<vmem>>, %arg2: memref<64x128xbf16, #tpu.memory_space<vmem>>, %arg3: memref<128x128xbf16, #tpu.memory_space<vmem>>, %arg4: memref<128x128xbf16, #tpu.memory_space<vmem>>, %arg5: memref<32x128xbf16, #tpu.memory_space<vmem>>) attributes {dimension_semantics = [#tpu.dimension_semantics<parallel>], iteration_bounds = array<i64: 2>, scalar_prefetch = 0 : i64, scratch_operands = 0 : i64, tpu.core_type = #tpu.core_type<tc>, window_params = [{transform_indices = @transform_0, window_bounds = array<i64: 32, 64>}, {pipeline_mode = #tpu.pipeline_mode<synchronous>, transform_indices = @transform_1, window_bounds = array<i64: 64, 128>}, {pipeline_mode = #tpu.pipeline_mode<synchronous>, transform_indices = @transform_2, window_bounds = array<i64: 128, 128>}, {pipeline_mode = #tpu.pipeline_mode<synchronous>, transform_indices = @transform_3, window_bounds = array<i64: 128, 128>}, {transform_indices = @transform_4, window_bounds = array<i64: 32, 128>}]} {
    %c0 = arith.constant 0 : index
    %c0_0 = arith.constant 0 : index
    %0 = vector.load %arg1[%c0, %c0_0] : memref<32x64xbf16, #tpu.memory_space<vmem>>, vector<32x64xbf16>
    %c0_1 = arith.constant 0 : index
    %c0_2 = arith.constant 0 : index
    %1 = vector.load %arg2[%c0_1, %c0_2] : memref<64x128xbf16, #tpu.memory_space<vmem>>, vector<64x128xbf16>
    %cst = arith.constant dense<0.000000e+00> : vector<32x128xf32>
    %2 = tpu.matmul %0, %1, %cst {dimension_numbers = #tpu.dot_dimension_numbers<[1], [0], [0], [1], [0, 0, 1, 1], [], []>} : vector<32x64xbf16>, vector<64x128xbf16>, vector<32x128xf32> -> vector<32x128xf32>
    %3 = arith.truncf %2 : vector<32x128xf32> to vector<32x128xbf16>
    %c0_3 = arith.constant 0 : index
    %c0_4 = arith.constant 0 : index
    %4 = vector.load %arg3[%c0_3, %c0_4] : memref<128x128xbf16, #tpu.memory_space<vmem>>, vector<128x128xbf16>
    %cst_5 = arith.constant dense<0.000000e+00> : vector<32x128xf32>
    %5 = tpu.matmul %3, %4, %cst_5 {dimension_numbers = #tpu.dot_dimension_numbers<[1], [0], [0], [1], [0, 0, 1, 1], [], []>} : vector<32x128xbf16>, vector<128x128xbf16>, vector<32x128xf32> -> vector<32x128xf32>
    %cst_6 = arith.constant 0.000000e+00 : f32
    %6 = vector.broadcast %cst_6 : f32 to vector<32x128xf32>
    %7 = arith.maximumf %5, %6 : vector<32x128xf32>
    %8 = arith.truncf %7 : vector<32x128xf32> to vector<32x128xbf16>
    %c0_7 = arith.constant 0 : index
    %c0_8 = arith.constant 0 : index
    %9 = vector.load %arg4[%c0_7, %c0_8] : memref<128x128xbf16, #tpu.memory_space<vmem>>, vector<128x128xbf16>
    %cst_9 = arith.constant dense<0.000000e+00> : vector<32x128xf32>
    %10 = tpu.matmul %8, %9, %cst_9 {dimension_numbers = #tpu.dot_dimension_numbers<[1], [0], [0], [1], [0, 0, 1, 1], [], []>} : vector<32x128xbf16>, vector<128x128xbf16>, vector<32x128xf32> -> vector<32x128xf32>
    %11 = arith.truncf %10 : vector<32x128xf32> to vector<32x128xbf16>
    %c0_10 = arith.constant 0 : index
    %c0_11 = arith.constant 0 : index
    %12 = vector.load %arg5[%c0_10, %c0_11] : memref<32x128xbf16, #tpu.memory_space<vmem>>, vector<32x128xbf16>
    tpu.vector_store %arg5[%c0_10, %c0_11], %11 {strides = array<i32>} : memref<32x128xbf16, #tpu.memory_space<vmem>>, vector<32x128xbf16>,
    return
  }
  func.func @transform_0(%arg0: i32) -> (i32, i32) {
    %c0_i32 = arith.constant 0 : i32
    %c0_i32_0 = arith.constant 0 : i32
    return %arg0, %c0_i32 : i32, i32
  }
  func.func @transform_1(%arg0: i32) -> (i32, i32) {
    %c0_i32 = arith.constant 0 : i32
    %c0_i32_0 = arith.constant 0 : i32
    %c0_i32_1 = arith.constant 0 : i32
    return %c0_i32, %c0_i32_0 : i32, i32
  }
  func.func @transform_2(%arg0: i32) -> (i32, i32) {
    %c0_i32 = arith.constant 0 : i32
    %c0_i32_0 = arith.constant 0 : i32
    %c0_i32_1 = arith.constant 0 : i32
    return %c0_i32, %c0_i32_0 : i32, i32
  }
  func.func @transform_3(%arg0: i32) -> (i32, i32) {
    %c0_i32 = arith.constant 0 : i32
    %c0_i32_0 = arith.constant 0 : i32
    %c0_i32_1 = arith.constant 0 : i32
    return %c0_i32, %c0_i32_0 : i32, i32
  }
  func.func @transform_4(%arg0: i32) -> (i32, i32) {
    %c0_i32 = arith.constant 0 : i32
    %c0_i32_0 = arith.constant 0 : i32
    return %arg0, %c0_i32 : i32, i32
  }
}

</mosaic_0001>

<llo_original>
// kernel: _fwd.2
$region0: #{_fwd.2}
  #allocation0 [shape = 'u32[]', space=smem, size = 0x4, offset = 0x4, fixed_abs, tag = 'smem constant byte address 0x4 - core index']
  #allocation1 [shape = 'u32[144,128]{1,0:T(1,128)}', space=vmem, size = 0x12000, scoped, tag = 'internal scratch']
  %s0 = inlined_call_operand.vmem [shape: bf16[64,64], index: 0, kind: input, shape index: {}]
  %s1 = inlined_call_operand.vmem [shape: bf16[64,128], index: 1, kind: input, shape index: {}]
  %s2 = inlined_call_operand.vmem [shape: bf16[128,128], index: 2, kind: input, shape index: {}]
  %s3 = inlined_call_operand.vmem [shape: bf16[128,128], index: 3, kind: input, shape index: {}]
  %s4 = inlined_call_operand.vmem [shape: bf16[64,128], index: 4, kind: output, shape index: {}]
  %s5 = sld [smem:[#allocation0]]
  $region49: #{_fwd.2} parent=0
    _
  %s7 = ssub.s32 1, %s5
  %s8 = scalar_select 0, %s7, %s5
  loop: start=0, step=1, limit=4
  $region2: #{_fwd.2} parent=0 // loop_pre_header
    _
  $region3: #{_fwd.2} parent=0 // loop_header
    %s10 = sphi 0, %s14
    %p11 = scmp.ge.s32.totalorder %s10, 4
    %s20 = sphi 0, %s22
    %s23 = sphi 0, %s20
    %s24 = sphi 0, %s23
    %s40 = sphi 0, %s24
    %s44 = sphi 0, %s44
    %s46 = sphi 0, %s44
    %s47 = sphi 0, %s46
    %s61 = sphi 0, %s47
    %s65 = sphi 0, %s65
    %s67 = sphi 0, %s65
    %s68 = sphi 0, %s67
    %s82 = sphi 0, %s68
    %s86 = sphi 0, %s86
    %s88 = sphi 0, %s86
    %s89 = sphi 0, %s88
    %s103 = sphi 0, %s89
    %s109 = sphi 0, %s111
    %s112 = sphi 0, %s109
    %s113 = sphi 0, %s112
    %s129 = sphi 0, %s113
  $region4: #{_fwd.2} parent=0 // loop_header_branch
    %13 = sbr.rel (%p11) target = $region8
  $region5: #{_fwd.2} parent=0 // loop_body
    %s15 = ssub.s32 %s10, 1
    %s16 = ssub.s32 %s10, 2
    %s17 = sadd.s32 %s10, 1
    %s18 = ssub.s32 %s10, %s17
    %p19 = scmp.eq.s32.totalorder %s18, 0
    %s21 = sadd.s32 %s20, 1
    %s22 = scalar_select %p19, %s20, %s21
    %p25 = pneg %p19
    %p26 = scmp.eq.s32.totalorder %s10, 1
    %p27 = por %p25, %p26
    %p28 = scmp.ne.s32.totalorder %s20, %s23
    %p29 = scmp.eq.s32.totalorder %s10, 0
    %p30 = por %p28, %p29
    %p31 = scmp.ne.s32.totalorder %s20, %s23
    %p32 = scmp.eq.s32.totalorder %s15, 1
    %p33 = por %p31, %p32
    %p34 = scmp.ne.s32.totalorder %s23, %s24
    %p35 = scmp.eq.s32.totalorder %s15, 0
    %p36 = por %p34, %p35
    %p37 = scmp.ne.s32.totalorder %s23, %s24
    %p38 = scmp.eq.s32.totalorder %s16, 1
    %p39 = por %p37, %p38
    %p41 = scmp.ne.s32.totalorder %s24, %s40
    %p42 = scmp.eq.s32.totalorder %s16, 0
    %p43 = por %p41, %p42
    %s45 = sadd.s32 %s44, 1
    %p48 = scmp.eq.s32.totalorder %s10, 1
    %p49 = scmp.ne.s32.totalorder %s44, %s46
    %p50 = scmp.eq.s32.totalorder %s10, 0
    %p51 = por %p49, %p50
    %p52 = scmp.ne.s32.totalorder %s44, %s46
    %p53 = scmp.eq.s32.totalorder %s15, 1
    %p54 = por %p52, %p53
    %p55 = scmp.ne.s32.totalorder %s46, %s47
    %p56 = scmp.eq.s32.totalorder %s15, 0
    %p57 = por %p55, %p56
    %p58 = scmp.ne.s32.totalorder %s46, %s47
    %p59 = scmp.eq.s32.totalorder %s16, 1
    %p60 = por %p58, %p59
    %p62 = scmp.ne.s32.totalorder %s47, %s61
    %p63 = scmp.eq.s32.totalorder %s16, 0
    %p64 = por %p62, %p63
    %s66 = sadd.s32 %s65, 1
    %p69 = scmp.eq.s32.totalorder %s10, 1
    %p70 = scmp.ne.s32.totalorder %s65, %s67
    %p71 = scmp.eq.s32.totalorder %s10, 0
    %p72 = por %p70, %p71
    %p73 = scmp.ne.s32.totalorder %s65, %s67
    %p74 = scmp.eq.s32.totalorder %s15, 1
    %p75 = por %p73, %p74
    %p76 = scmp.ne.s32.totalorder %s67, %s68
    %p77 = scmp.eq.s32.totalorder %s15, 0
    %p78 = por %p76, %p77
    %p79 = scmp.ne.s32.totalorder %s67, %s68
    %p80 = scmp.eq.s32.totalorder %s16, 1
    %p81 = por %p79, %p80
    %p83 = scmp.ne.s32.totalorder %s68, %s82
    %p84 = scmp.eq.s32.totalorder %s16, 0
    %p85 = por %p83, %p84
    %s87 = sadd.s32 %s86, 1
    %p90 = scmp.eq.s32.totalorder %s10, 1
    %p91 = scmp.ne.s32.totalorder %s86, %s88
    %p92 = scmp.eq.s32.totalorder %s10, 0
    %p93 = por %p91, %p92
    %p94 = scmp.ne.s32.totalorder %s86, %s88
    %p95 = scmp.eq.s32.totalorder %s15, 1
    %p96 = por %p94, %p95
    %p97 = scmp.ne.s32.totalorder %s88, %s89
    %p98 = scmp.eq.s32.totalorder %s15, 0
    %p99 = por %p97, %p98
    %p100 = scmp.ne.s32.totalorder %s88, %s89
    %p101 = scmp.eq.s32.totalorder %s16, 1
    %p102 = por %p100, %p101
    %p104 = scmp.ne.s32.totalorder %s89, %s103
    %p105 = scmp.eq.s32.totalorder %s16, 0
    %p106 = por %p104, %p105
    %s107 = ssub.s32 %s10, %s17
    %p108 = scmp.eq.s32.totalorder %s107, 0
    %s110 = sadd.s32 %s109, 1
    %s111 = scalar_select %p108, %s109, %s110
    %p114 = pneg %p108
    %p115 = scmp.eq.s32.totalorder %s10, 1
    %p116 = por %p114, %p115
    %p117 = scmp.ne.s32.totalorder %s109, %s112
    %p118 = scmp.eq.s32.totalorder %s10, 0
    %p119 = por %p117, %p118
    %p120 = scmp.ne.s32.totalorder %s109, %s112
    %p121 = scmp.eq.s32.totalorder %s15, 1
    %p122 = por %p120, %p121
    %p123 = scmp.ne.s32.totalorder %s112, %s113
    %p124 = scmp.eq.s32.totalorder %s15, 0
    %p125 = por %p123, %p124
    %p126 = scmp.ne.s32.totalorder %s112, %s113
    %p127 = scmp.eq.s32.totalorder %s16, 1
    %p128 = por %p126, %p127
    %p130 = scmp.ne.s32.totalorder %s113, %s129
    %p131 = scmp.eq.s32.totalorder %s16, 0
    %p132 = por %p130, %p131
    %p133 = scmp.le.s32.totalorder 1, %s10
    %p134 = scmp.lt.s32.totalorder %s10, 3
    %p135 = pnand %p133, %p134
    %p136 = pneg %p135
    // Predicated region
    $region9: #{_fwd.2} parent=5 // pred_check
      _
    $region10: #{_fwd.2} parent=5 // pred_check_branch
      %138 = sbr.rel (%p135) target = $region12
    $region11: #{_fwd.2} parent=5 // pred_region
      %s139 = ssub.s32 %s10, 1
      // Predicated region
      $region13: #{_fwd.2} parent=11 // pred_check
        %p140 = pneg %p57
      $region14: #{_fwd.2} parent=11 // pred_check_branch
        %142 = sbr.rel (%p140) target = $region16
      $region15: #{_fwd.2} parent=11 // pred_region
        _
      $region16: #{_fwd.2} parent=11 // pred_fallthru
        _
      // Predicated region
      $region17: #{_fwd.2} parent=11 // pred_check
        %p143 = pneg %p78
      $region18: #{_fwd.2} parent=11 // pred_check_branch
        %145 = sbr.rel (%p143) target = $region20
      $region19: #{_fwd.2} parent=11 // pred_region
        _
      $region20: #{_fwd.2} parent=11 // pred_fallthru
        _
      // Predicated region
      $region21: #{_fwd.2} parent=11 // pred_check
        %p146 = pneg %p99
      $region22: #{_fwd.2} parent=11 // pred_check_branch
        %148 = sbr.rel (%p146) target = $region24
      $region23: #{_fwd.2} parent=11 // pred_region
        _
      $region24: #{_fwd.2} parent=11 // pred_fallthru
        _
    $region12: #{_fwd.2} parent=5 // pred_fallthru
      _
    %p149 = scmp.lt.s32.totalorder %s10, 2
    // Predicated region
    $region25: #{_fwd.2} parent=5 // pred_check
      %p150 = pneg %p149
    $region26: #{_fwd.2} parent=5 // pred_check_branch
      %152 = sbr.rel (%p150) target = $region28
    $region27: #{_fwd.2} parent=5 // pred_region
      // Predicated region
      $region29: #{_fwd.2} parent=27 // pred_check
        %p153 = pneg %p30
      $region30: #{_fwd.2} parent=27 // pred_check_branch
        %155 = sbr.rel (%p153) target = $region32
      $region31: #{_fwd.2} parent=27 // pred_region
        %s156 = smul.u32 4, %s10
        %p157 = scmp.lt.s32.totalorder %s156, 7
        %s158 = scalar_select %p157, %s156, 7
        %s159 = smul.addr %s158, 4
        %s160 = scalar_lea.vmem %s0, %s159
        %s161 = smul.u32 4, %s10
      $region32: #{_fwd.2} parent=27 // pred_fallthru
        _
    $region28: #{_fwd.2} parent=5 // pred_fallthru
      _
    %p162 = scmp.le.s32.totalorder 1, %s10
    %p163 = scmp.lt.s32.totalorder %s10, 3
    %p164 = pnand %p162, %p163
    %p165 = pneg %p164
    // Predicated region
    $region33: #{_fwd.2} parent=5 // pred_check
      _
    $region34: #{_fwd.2} parent=5 // pred_check_branch
      %167 = sbr.rel (%p164) target = $region36
    $region35: #{_fwd.2} parent=5 // pred_region
      %s168 = ssub.s32 %s10, 1
      %s169 = smul.u32 4, %s15
      %p170 = scmp.lt.s32.totalorder %s169, 7
      %s171 = scalar_select %p170, %s169, 7
      %s172 = smul.addr %s171, 4
      %s173 = scalar_lea.vmem %s0, %s172
      %p174 = pneg %p36
      %p175 = pneg %p33
      %p176 = pneg %p57
      %p177 = pneg %p54
      %p178 = pneg %p78
      %p179 = pneg %p75
      %p180 = pneg %p99
      %p181 = pneg %p96
      %p182 = pneg %p125
      %p183 = pneg %p122
      %s184 = smul.u32 4, %s15
      %p185 = scmp.lt.s32.totalorder %s184, 7
      %s186 = scalar_select %p185, %s184, 7
      %s187 = smul.addr %s186, 4
      %s188 = scalar_lea.vmem %s4, %s187
      %s189 = smul.u32 4, %s15
      %p190 = scmp.lt.s32.totalorder %s189, 7
      %s191 = scalar_select %p190, %s189, 7
      %s192 = smul.addr %s191, 4
      %s193 = scalar_lea.vmem %s0, %s192
      %s194 = smul.u32 4, %s15
      %s195 = smul.u32 4, %s15
      %p196 = scmp.lt.s32.totalorder %s195, 7
      %s197 = scalar_select %p196, %s195, 7
      %s198 = smul.addr %s197, 4
      %s199 = scalar_lea.vmem %s4, %s198
      %s200 = smul.u32 4, %s15
      %v202 = vld [vmem:[%s193] sm:$0xf]
      %v203 = vld [vmem:[%s193 + $0x4] sm:$0xf]
      %v204 = vld [vmem:[%s193 + $0x8] sm:$0xf]
      %v205 = vld [vmem:[%s193 + $0xc] sm:$0xf]
      %v206 = vld [vmem:[%s1] sm:$0xf]
      %v207 = vld [vmem:[%s1 + $0x4] sm:$0xf]
      %v208 = vld [vmem:[%s1 + $0x8] sm:$0xf]
      %v209 = vld [vmem:[%s1 + $0xc] sm:$0xf]
      %v210 = vld [vmem:[%s1 + $0x10] sm:$0xf]
      %v211 = vld [vmem:[%s1 + $0x14] sm:$0xf]
      %v212 = vld [vmem:[%s1 + $0x18] sm:$0xf]
      %v213 = vld [vmem:[%s1 + $0x1c] sm:$0xf]
      %v218 = vunpack.c.l.b16 %v202
      %v219 = vunpack.c.l.b16 %v203
      %v220 = vunpack.c.l.b16 %v204
      %v221 = vunpack.c.l.b16 %v205
      %v222 = vpack.c.b16 %v219, %v218
      %v223 = vpack.c.b16 %v221, %v220
      %v232 = vunpack.c.l.b16 %v206
      %v233 = vunpack.c.l.b16 %v207
      %v234 = vunpack.c.l.b16 %v208
      %v235 = vunpack.c.l.b16 %v209
      %v236 = vunpack.c.l.b16 %v210
      %v237 = vunpack.c.l.b16 %v211
      %v238 = vunpack.c.l.b16 %v212
      %v239 = vunpack.c.l.b16 %v213
      %v240 = vpack.c.b16 %v233, %v232
      %v241 = vpack.c.b16 %v235, %v234
      %v242 = vpack.c.b16 %v237, %v236
      %v243 = vpack.c.b16 %v239, %v238
      %vm248 = vcmask 523264
      %v250 = vsel %vm248, %v222, 0
      %v253 = vsel %vm248, %v223, 0
      %255 = vmatprep.subr.bf16.mxu0 0
      %256 = vmatpush1.bf16.msra.mxu0 %v240
      %257 = vmatprep.subr.bf16.mxu0 0
      %258 = vmatpush1.bf16.msra.mxu0 %v241
      %259 = vmatprep.subr.bf16.mxu0 0
      %260 = vmatpush1.bf16.msra.mxu0 %v242
      %261 = vmatprep.subr.bf16.mxu0 0
      %262 = vmatpush1.bf16.msra.mxu0 %v243
      %263 = vmatprep.subr.bf16.mxu0 0
      %264 = vmatpush1.bf16.msra.mxu0 0
      %265 = vmatprep.subr.bf16.mxu0 0
      %266 = vmatpush1.bf16.msra.mxu0 0
      %267 = vmatprep.subr.bf16.mxu0 0
      %268 = vmatpush1.bf16.msra.mxu0 0
      %269 = vmatprep.subr.bf16.mxu0 0
      %270 = vmatpush1.bf16.msra.mxu0 0
      %271 = vmatprep.subr.bf16.mxu0 0
      %272 = vmatpush1.bf16.msra.mxu0 0
      %273 = vmatprep.subr.bf16.mxu0 0
      %274 = vmatpush1.bf16.msra.mxu0 0
      %275 = vmatprep.subr.bf16.mxu0 0
      %276 = vmatpush1.bf16.msra.mxu0 0
      %277 = vmatprep.subr.bf16.mxu0 0
      %278 = vmatpush1.bf16.msra.mxu0 0
      %279 = vmatprep.subr.bf16.mxu0 0
      %280 = vmatpush1.bf16.msra.mxu0 0
      %281 = vmatprep.subr.bf16.mxu0 0
      %282 = vmatpush1.bf16.msra.mxu0 0
      %283 = vmatprep.subr.bf16.mxu0 0
      %284 = vmatpush1.bf16.msra.mxu0 0
      %285 = vmatprep.subr.bf16.mxu0 0
      %286 = vmatpush1.bf16.msra.mxu0 0
      %287 = vmatprep.mubr.bf16.mxu0 0
      %288 = vmatmul.mubr.bf16.gmra.mrb[0].mxu0 %v250
      %v289 = vpop.f32.mrb[0].mxu0
      %v290 = vadd.f32 0.0, %v289
      %v291 = vpop.f32.mrb[0].mxu0
      %v292 = vpop.f32.mrb[0].mxu0
      %v293 = vadd.f32 0.0, %v292
      %v294 = vpop.f32.mrb[0].mxu0
      %295 = vmatprep.mubr.bf16.mxu0 0
      %296 = vmatmul.mubr.bf16.gmra.mrb[0].mxu0 %v253
      %v297 = vpop.f32.mrb[0].mxu0
      %v298 = vadd.f32 0.0, %v297
      %v299 = vpop.f32.mrb[0].mxu0
      %v300 = vpop.f32.mrb[0].mxu0
      %v301 = vadd.f32 0.0, %v300
      %v302 = vpop.f32.mrb[0].mxu0
      %303 = vdwg.mxu0
      %v304 = vpack.c.bf16 %v293, %v290
      %v305 = vpack.c.bf16 %v301, %v298
      %v306 = vld [vmem:[%s2] sm:$0xf]
      %v307 = vld [vmem:[%s2 + $0x4] sm:$0xf]
      %v308 = vld [vmem:[%s2 + $0x8] sm:$0xf]
      %v309 = vld [vmem:[%s2 + $0xc] sm:$0xf]
      %v310 = vld [vmem:[%s2 + $0x10] sm:$0xf]
      %v311 = vld [vmem:[%s2 + $0x14] sm:$0xf]
      %v312 = vld [vmem:[%s2 + $0x18] sm:$0xf]
      %v313 = vld [vmem:[%s2 + $0x1c] sm:$0xf]
      %v314 = vld [vmem:[%s2 + $0x20] sm:$0xf]
      %v315 = vld [vmem:[%s2 + $0x24] sm:$0xf]
      %v316 = vld [vmem:[%s2 + $0x28] sm:$0xf]
      %v317 = vld [vmem:[%s2 + $0x2c] sm:$0xf]
      %v318 = vld [vmem:[%s2 + $0x30] sm:$0xf]
      %v319 = vld [vmem:[%s2 + $0x34] sm:$0xf]
      %v320 = vld [vmem:[%s2 + $0x38] sm:$0xf]
      %v321 = vld [vmem:[%s2 + $0x3c] sm:$0xf]
      %v338 = vunpack.c.l.b16 %v306
      %v339 = vunpack.c.l.b16 %v307
      %v340 = vunpack.c.l.b16 %v308
      %v341 = vunpack.c.l.b16 %v309
      %v342 = vunpack.c.l.b16 %v310
      %v343 = vunpack.c.l.b16 %v311
      %v344 = vunpack.c.l.b16 %v312
      %v345 = vunpack.c.l.b16 %v313
      %v346 = vunpack.c.l.b16 %v314
      %v347 = vunpack.c.l.b16 %v315
      %v348 = vunpack.c.l.b16 %v316
      %v349 = vunpack.c.l.b16 %v317
      %v350 = vunpack.c.l.b16 %v318
      %v351 = vunpack.c.l.b16 %v319
      %v352 = vunpack.c.l.b16 %v320
      %v353 = vunpack.c.l.b16 %v321
      %v354 = vpack.c.b16 %v339, %v338
      %v355 = vpack.c.b16 %v341, %v340
      %v356 = vpack.c.b16 %v343, %v342
      %v357 = vpack.c.b16 %v345, %v344
      %v358 = vpack.c.b16 %v347, %v346
      %v359 = vpack.c.b16 %v349, %v348
      %v360 = vpack.c.b16 %v351, %v350
      %v361 = vpack.c.b16 %v353, %v352
      %370 = vmatprep.subr.bf16.mxu0 0
      %371 = vmatpush1.bf16.msra.mxu0 %v354
      %372 = vmatprep.subr.bf16.mxu0 0
      %373 = vmatpush1.bf16.msra.mxu0 %v355
      %374 = vmatprep.subr.bf16.mxu0 0
      %375 = vmatpush1.bf16.msra.mxu0 %v356
      %376 = vmatprep.subr.bf16.mxu0 0
      %377 = vmatpush1.bf16.msra.mxu0 %v357
      %378 = vmatprep.subr.bf16.mxu0 0
      %379 = vmatpush1.bf16.msra.mxu0 %v358
      %380 = vmatprep.subr.bf16.mxu0 0
      %381 = vmatpush1.bf16.msra.mxu0 %v359
      %382 = vmatprep.subr.bf16.mxu0 0
      %383 = vmatpush1.bf16.msra.mxu0 %v360
      %384 = vmatprep.subr.bf16.mxu0 0
      %385 = vmatpush1.bf16.msra.mxu0 %v361
      %386 = vmatprep.subr.bf16.mxu0 0
      %387 = vmatpush1.bf16.msra.mxu0 0
      %388 = vmatprep.subr.bf16.mxu0 0
      %389 = vmatpush1.bf16.msra.mxu0 0
      %390 = vmatprep.subr.bf16.mxu0 0
      %391 = vmatpush1.bf16.msra.mxu0 0
      %392 = vmatprep.subr.bf16.mxu0 0
      %393 = vmatpush1.bf16.msra.mxu0 0
      %394 = vmatprep.subr.bf16.mxu0 0
      %395 = vmatpush1.bf16.msra.mxu0 0
      %396 = vmatprep.subr.bf16.mxu0 0
      %397 = vmatpush1.bf16.msra.mxu0 0
      %398 = vmatprep.subr.bf16.mxu0 0
      %399 = vmatpush1.bf16.msra.mxu0 0
      %400 = vmatprep.subr.bf16.mxu0 0
      %401 = vmatpush1.bf16.msra.mxu0 0
      %402 = vmatprep.mubr.bf16.mxu0 0
      %403 = vmatmul.mubr.bf16.gmra.mrb[0].mxu0 %v304
      %v404 = vpop.f32.mrb[0].mxu0
      %v405 = vadd.f32 0.0, %v404
      %v406 = vpop.f32.mrb[0].mxu0
      %v407 = vpop.f32.mrb[0].mxu0
      %v408 = vadd.f32 0.0, %v407
      %v409 = vpop.f32.mrb[0].mxu0
      %410 = vmatprep.mubr.bf16.mxu0 0
      %411 = vmatmul.mubr.bf16.gmra.mrb[0].mxu0 %v305
      %v412 = vpop.f32.mrb[0].mxu0
      %v413 = vadd.f32 0.0, %v412
      %v414 = vpop.f32.mrb[0].mxu0
      %v415 = vpop.f32.mrb[0].mxu0
      %v416 = vadd.f32 0.0, %v415
      %v417 = vpop.f32.mrb[0].mxu0
      %418 = vdwg.mxu0
      %v419 = vmax.f32 %v405, 0.0
      %v420 = vmax.f32 %v408, 0.0
      %v421 = vmax.f32 %v413, 0.0
      %v422 = vmax.f32 %v416, 0.0
      %v423 = vpack.c.bf16 %v420, %v419
      %v424 = vpack.c.bf16 %v422, %v421
      %v425 = vld [vmem:[%s3] sm:$0xf]
      %v426 = vld [vmem:[%s3 + $0x4] sm:$0xf]
      %v427 = vld [vmem:[%s3 + $0x8] sm:$0xf]
      %v428 = vld [vmem:[%s3 + $0xc] sm:$0xf]
      %v429 = vld [vmem:[%s3 + $0x10] sm:$0xf]
      %v430 = vld [vmem:[%s3 + $0x14] sm:$0xf]
      %v431 = vld [vmem:[%s3 + $0x18] sm:$0xf]
      %v432 = vld [vmem:[%s3 + $0x1c] sm:$0xf]
      %v433 = vld [vmem:[%s3 + $0x20] sm:$0xf]
      %v434 = vld [vmem:[%s3 + $0x24] sm:$0xf]
      %v435 = vld [vmem:[%s3 + $0x28] sm:$0xf]
      %v436 = vld [vmem:[%s3 + $0x2c] sm:$0xf]
      %v437 = vld [vmem:[%s3 + $0x30] sm:$0xf]
      %v438 = vld [vmem:[%s3 + $0x34] sm:$0xf]
      %v439 = vld [vmem:[%s3 + $0x38] sm:$0xf]
      %v440 = vld [vmem:[%s3 + $0x3c] sm:$0xf]
      %v457 = vunpack.c.l.b16 %v425
      %v458 = vunpack.c.l.b16 %v426
      %v459 = vunpack.c.l.b16 %v427
      %v460 = vunpack.c.l.b16 %v428
      %v461 = vunpack.c.l.b16 %v429
      %v462 = vunpack.c.l.b16 %v430
      %v463 = vunpack.c.l.b16 %v431
      %v464 = vunpack.c.l.b16 %v432
      %v465 = vunpack.c.l.b16 %v433
      %v466 = vunpack.c.l.b16 %v434
      %v467 = vunpack.c.l.b16 %v435
      %v468 = vunpack.c.l.b16 %v436
      %v469 = vunpack.c.l.b16 %v437
      %v470 = vunpack.c.l.b16 %v438
      %v471 = vunpack.c.l.b16 %v439
      %v472 = vunpack.c.l.b16 %v440
      %v473 = vpack.c.b16 %v458, %v457
      %v474 = vpack.c.b16 %v460, %v459
      %v475 = vpack.c.b16 %v462, %v461
      %v476 = vpack.c.b16 %v464, %v463
      %v477 = vpack.c.b16 %v466, %v465
      %v478 = vpack.c.b16 %v468, %v467
      %v479 = vpack.c.b16 %v470, %v469
      %v480 = vpack.c.b16 %v472, %v471
      %489 = vmatprep.subr.bf16.mxu0 0
      %490 = vmatpush1.bf16.msra.mxu0 %v473
      %491 = vmatprep.subr.bf16.mxu0 0
      %492 = vmatpush1.bf16.msra.mxu0 %v474
      %493 = vmatprep.subr.bf16.mxu0 0
      %494 = vmatpush1.bf16.msra.mxu0 %v475
      %495 = vmatprep.subr.bf16.mxu0 0
      %496 = vmatpush1.bf16.msra.mxu0 %v476
      %497 = vmatprep.subr.bf16.mxu0 0
      %498 = vmatpush1.bf16.msra.mxu0 %v477
      %499 = vmatprep.subr.bf16.mxu0 0
      %500 = vmatpush1.bf16.msra.mxu0 %v478
      %501 = vmatprep.subr.bf16.mxu0 0
      %502 = vmatpush1.bf16.msra.mxu0 %v479
      %503 = vmatprep.subr.bf16.mxu0 0
      %504 = vmatpush1.bf16.msra.mxu0 %v480
      %505 = vmatprep.subr.bf16.mxu0 0
      %506 = vmatpush1.bf16.msra.mxu0 0
      %507 = vmatprep.subr.bf16.mxu0 0
      %508 = vmatpush1.bf16.msra.mxu0 0
      %509 = vmatprep.subr.bf16.mxu0 0
      %510 = vmatpush1.bf16.msra.mxu0 0
      %511 = vmatprep.subr.bf16.mxu0 0
      %512 = vmatpush1.bf16.msra.mxu0 0
      %513 = vmatprep.subr.bf16.mxu0 0
      %514 = vmatpush1.bf16.msra.mxu0 0
      %515 = vmatprep.subr.bf16.mxu0 0
      %516 = vmatpush1.bf16.msra.mxu0 0
      %517 = vmatprep.subr.bf16.mxu0 0
      %518 = vmatpush1.bf16.msra.mxu0 0
      %519 = vmatprep.subr.bf16.mxu0 0
      %520 = vmatpush1.bf16.msra.mxu0 0
      %521 = vmatprep.mubr.bf16.mxu0 0
      %522 = vmatmul.mubr.bf16.gmra.mrb[0].mxu0 %v423
      %v523 = vpop.f32.mrb[0].mxu0
      %v524 = vadd.f32 0.0, %v523
      %v525 = vpop.f32.mrb[0].mxu0
      %v526 = vpop.f32.mrb[0].mxu0
      %v527 = vadd.f32 0.0, %v526
      %v528 = vpop.f32.mrb[0].mxu0
      %529 = vmatprep.mubr.bf16.mxu0 0
      %530 = vmatmul.mubr.bf16.gmra.mrb[0].mxu0 %v424
      %v531 = vpop.f32.mrb[0].mxu0
      %v532 = vadd.f32 0.0, %v531
      %v533 = vpop.f32.mrb[0].mxu0
      %v534 = vpop.f32.mrb[0].mxu0
      %v535 = vadd.f32 0.0, %v534
      %v536 = vpop.f32.mrb[0].mxu0
      %537 = vdwg.mxu0
      %v538 = vpack.c.bf16 %v527, %v524
      %v539 = vpack.c.bf16 %v535, %v532
      %v542 = vunpack.c.l.b16 %v538
      %v543 = vunpack.c.h.b16 %v538
      %v544 = vunpack.c.l.b16 %v539
      %v545 = vunpack.c.h.b16 %v539
      %v546 = vpack.c.b16 %v542, %v542
      %v547 = vpack.c.b16 %v543, %v543
      %v548 = vpack.c.b16 %v544, %v544
      %v549 = vpack.c.b16 %v545, %v545
      %554 = vst [vmem:[%s199] sm:$0xf] %v546
      %555 = vst [vmem:[%s199 + $0x4] sm:$0xf] %v547
      %556 = vst [vmem:[%s199 + $0x8] sm:$0xf] %v548
      %557 = vst [vmem:[%s199 + $0xc] sm:$0xf] %v549
      %s558 = smul.u32 4, %s15
      %p559 = scmp.lt.s32.totalorder %s558, 7
      %s560 = scalar_select %p559, %s558, 7
      %s561 = smul.addr %s560, 4
      %s562 = scalar_lea.vmem %s4, %s561
      // Predicated region
      $region37: #{_fwd.2} parent=35 // pred_check
        %p563 = pneg %p122
      $region38: #{_fwd.2} parent=35 // pred_check_branch
        %565 = sbr.rel (%p563) target = $region40
      $region39: #{_fwd.2} parent=35 // pred_region
        %s566 = smul.u32 4, %s15
      $region40: #{_fwd.2} parent=35 // pred_fallthru
        _
    $region36: #{_fwd.2} parent=5 // pred_fallthru
      _
    %p567 = scmp.le.s32.totalorder 2, %s10
    // Predicated region
    $region41: #{_fwd.2} parent=5 // pred_check
      %p568 = pneg %p567
    $region42: #{_fwd.2} parent=5 // pred_check_branch
      %570 = sbr.rel (%p568) target = $region44
    $region43: #{_fwd.2} parent=5 // pred_region
      %s571 = ssub.s32 %s10, 2
      // Predicated region
      $region45: #{_fwd.2} parent=43 // pred_check
        %p572 = pneg %p128
      $region46: #{_fwd.2} parent=43 // pred_check_branch
        %574 = sbr.rel (%p572) target = $region48
      $region47: #{_fwd.2} parent=43 // pred_region
        %s575 = smul.u32 4, %s16
        %p576 = scmp.lt.s32.totalorder %s575, 7
        %s577 = scalar_select %p576, %s575, 7
        %s578 = smul.addr %s577, 4
        %s579 = scalar_lea.vmem %s4, %s578
      $region48: #{_fwd.2} parent=43 // pred_fallthru
        _
    $region44: #{_fwd.2} parent=5 // pred_fallthru
      _
  $region6: #{_fwd.2} parent=0 // loop_footer
    %s14 = sadd.s32 1, %s10
  $region7: #{_fwd.2} parent=0 // loop_footer_branch
    %9 = sbr.rel target = $region3
  $region8: #{_fwd.2} parent=0 // loop_exit
    _

// kernel: _fwd.3
$region0: #{_fwd.3}
  #allocation0 [shape = 'u32[]', space=smem, size = 0x4, offset = 0x4, fixed_abs, tag = 'smem constant byte address 0x4 - core index']
  #allocation1 [shape = 'u32[144,128]{1,0:T(1,128)}', space=vmem, size = 0x12000, scoped, tag = 'internal scratch']
  %s0 = inlined_call_operand.vmem [shape: bf16[64,64], index: 0, kind: input, shape index: {}]
  %s1 = inlined_call_operand.vmem [shape: bf16[64,128], index: 1, kind: input, shape index: {}]
  %s2 = inlined_call_operand.vmem [shape: bf16[128,128], index: 2, kind: input, shape index: {}]
  %s3 = inlined_call_operand.vmem [shape: f32[1,128], index: 3, kind: input, shape index: {}]
  %s4 = inlined_call_operand.vmem [shape: f32[64,128], index: 4, kind: output, shape index: {0}]
  %s5 = inlined_call_operand.vmem [shape: f32[64,128], index: 5, kind: output, shape index: {1}]
  %6 = xla_tuple %s4, %s5
  %s7 = sld [smem:[#allocation0]]
  $region57: #{_fwd.3} parent=0
    _
  %s9 = ssub.s32 1, %s7
  %s10 = scalar_select 0, %s9, %s7
  loop: start=0, step=1, limit=4
  $region2: #{_fwd.3} parent=0 // loop_pre_header
    _
  $region3: #{_fwd.3} parent=0 // loop_header
    %s12 = sphi 0, %s16
    %p13 = scmp.ge.s32.totalorder %s12, 4
    %s22 = sphi 0, %s24
    %s25 = sphi 0, %s22
    %s26 = sphi 0, %s25
    %s42 = sphi 0, %s26
    %s46 = sphi 0, %s46
    %s48 = sphi 0, %s46
    %s49 = sphi 0, %s48
    %s63 = sphi 0, %s49
    %s67 = sphi 0, %s67
    %s69 = sphi 0, %s67
    %s70 = sphi 0, %s69
    %s84 = sphi 0, %s70
    %s88 = sphi 0, %s88
    %s90 = sphi 0, %s88
    %s91 = sphi 0, %s90
    %s105 = sphi 0, %s91
    %s111 = sphi 0, %s113
    %s114 = sphi 0, %s111
    %s115 = sphi 0, %s114
    %s131 = sphi 0, %s115
    %s137 = sphi 0, %s139
    %s140 = sphi 0, %s137
    %s141 = sphi 0, %s140
    %s157 = sphi 0, %s141
  $region4: #{_fwd.3} parent=0 // loop_header_branch
    %15 = sbr.rel (%p13) target = $region8
  $region5: #{_fwd.3} parent=0 // loop_body
    %s17 = ssub.s32 %s12, 1
    %s18 = ssub.s32 %s12, 2
    %s19 = sadd.s32 %s12, 1
    %s20 = ssub.s32 %s12, %s19
    %p21 = scmp.eq.s32.totalorder %s20, 0
    %s23 = sadd.s32 %s22, 1
    %s24 = scalar_select %p21, %s22, %s23
    %p27 = pneg %p21
    %p28 = scmp.eq.s32.totalorder %s12, 1
    %p29 = por %p27, %p28
    %p30 = scmp.ne.s32.totalorder %s22, %s25
    %p31 = scmp.eq.s32.totalorder %s12, 0
    %p32 = por %p30, %p31
    %p33 = scmp.ne.s32.totalorder %s22, %s25
    %p34 = scmp.eq.s32.totalorder %s17, 1
    %p35 = por %p33, %p34
    %p36 = scmp.ne.s32.totalorder %s25, %s26
    %p37 = scmp.eq.s32.totalorder %s17, 0
    %p38 = por %p36, %p37
    %p39 = scmp.ne.s32.totalorder %s25, %s26
    %p40 = scmp.eq.s32.totalorder %s18, 1
    %p41 = por %p39, %p40
    %p43 = scmp.ne.s32.totalorder %s26, %s42
    %p44 = scmp.eq.s32.totalorder %s18, 0
    %p45 = por %p43, %p44
    %s47 = sadd.s32 %s46, 1
    %p50 = scmp.eq.s32.totalorder %s12, 1
    %p51 = scmp.ne.s32.totalorder %s46, %s48
    %p52 = scmp.eq.s32.totalorder %s12, 0
    %p53 = por %p51, %p52
    %p54 = scmp.ne.s32.totalorder %s46, %s48
    %p55 = scmp.eq.s32.totalorder %s17, 1
    %p56 = por %p54, %p55
    %p57 = scmp.ne.s32.totalorder %s48, %s49
    %p58 = scmp.eq.s32.totalorder %s17, 0
    %p59 = por %p57, %p58
    %p60 = scmp.ne.s32.totalorder %s48, %s49
    %p61 = scmp.eq.s32.totalorder %s18, 1
    %p62 = por %p60, %p61
    %p64 = scmp.ne.s32.totalorder %s49, %s63
    %p65 = scmp.eq.s32.totalorder %s18, 0
    %p66 = por %p64, %p65
    %s68 = sadd.s32 %s67, 1
    %p71 = scmp.eq.s32.totalorder %s12, 1
    %p72 = scmp.ne.s32.totalorder %s67, %s69
    %p73 = scmp.eq.s32.totalorder %s12, 0
    %p74 = por %p72, %p73
    %p75 = scmp.ne.s32.totalorder %s67, %s69
    %p76 = scmp.eq.s32.totalorder %s17, 1
    %p77 = por %p75, %p76
    %p78 = scmp.ne.s32.totalorder %s69, %s70
    %p79 = scmp.eq.s32.totalorder %s17, 0
    %p80 = por %p78, %p79
    %p81 = scmp.ne.s32.totalorder %s69, %s70
    %p82 = scmp.eq.s32.totalorder %s18, 1
    %p83 = por %p81, %p82
    %p85 = scmp.ne.s32.totalorder %s70, %s84
    %p86 = scmp.eq.s32.totalorder %s18, 0
    %p87 = por %p85, %p86
    %s89 = sadd.s32 %s88, 1
    %p92 = scmp.eq.s32.totalorder %s12, 1
    %p93 = scmp.ne.s32.totalorder %s88, %s90
    %p94 = scmp.eq.s32.totalorder %s12, 0
    %p95 = por %p93, %p94
    %p96 = scmp.ne.s32.totalorder %s88, %s90
    %p97 = scmp.eq.s32.totalorder %s17, 1
    %p98 = por %p96, %p97
    %p99 = scmp.ne.s32.totalorder %s90, %s91
    %p100 = scmp.eq.s32.totalorder %s17, 0
    %p101 = por %p99, %p100
    %p102 = scmp.ne.s32.totalorder %s90, %s91
    %p103 = scmp.eq.s32.totalorder %s18, 1
    %p104 = por %p102, %p103
    %p106 = scmp.ne.s32.totalorder %s91, %s105
    %p107 = scmp.eq.s32.totalorder %s18, 0
    %p108 = por %p106, %p107
    %s109 = ssub.s32 %s12, %s19
    %p110 = scmp.eq.s32.totalorder %s109, 0
    %s112 = sadd.s32 %s111, 1
    %s113 = scalar_select %p110, %s111, %s112
    %p116 = pneg %p110
    %p117 = scmp.eq.s32.totalorder %s12, 1
    %p118 = por %p116, %p117
    %p119 = scmp.ne.s32.totalorder %s111, %s114
    %p120 = scmp.eq.s32.totalorder %s12, 0
    %p121 = por %p119, %p120
    %p122 = scmp.ne.s32.totalorder %s111, %s114
    %p123 = scmp.eq.s32.totalorder %s17, 1
    %p124 = por %p122, %p123
    %p125 = scmp.ne.s32.totalorder %s114, %s115
    %p126 = scmp.eq.s32.totalorder %s17, 0
    %p127 = por %p125, %p126
    %p128 = scmp.ne.s32.totalorder %s114, %s115
    %p129 = scmp.eq.s32.totalorder %s18, 1
    %p130 = por %p128, %p129
    %p132 = scmp.ne.s32.totalorder %s115, %s131
    %p133 = scmp.eq.s32.totalorder %s18, 0
    %p134 = por %p132, %p133
    %s135 = ssub.s32 %s12, %s19
    %p136 = scmp.eq.s32.totalorder %s135, 0
    %s138 = sadd.s32 %s137, 1
    %s139 = scalar_select %p136, %s137, %s138
    %p142 = pneg %p136
    %p143 = scmp.eq.s32.totalorder %s12, 1
    %p144 = por %p142, %p143
    %p145 = scmp.ne.s32.totalorder %s137, %s140
    %p146 = scmp.eq.s32.totalorder %s12, 0
    %p147 = por %p145, %p146
    %p148 = scmp.ne.s32.totalorder %s137, %s140
    %p149 = scmp.eq.s32.totalorder %s17, 1
    %p150 = por %p148, %p149
    %p151 = scmp.ne.s32.totalorder %s140, %s141
    %p152 = scmp.eq.s32.totalorder %s17, 0
    %p153 = por %p151, %p152
    %p154 = scmp.ne.s32.totalorder %s140, %s141
    %p155 = scmp.eq.s32.totalorder %s18, 1
    %p156 = por %p154, %p155
    %p158 = scmp.ne.s32.totalorder %s141, %s157
    %p159 = scmp.eq.s32.totalorder %s18, 0
    %p160 = por %p158, %p159
    %p161 = scmp.le.s32.totalorder 1, %s12
    %p162 = scmp.lt.s32.totalorder %s12, 3
    %p163 = pnand %p161, %p162
    %p164 = pneg %p163
    // Predicated region
    $region9: #{_fwd.3} parent=5 // pred_check
      _
    $region10: #{_fwd.3} parent=5 // pred_check_branch
      %166 = sbr.rel (%p163) target = $region12
    $region11: #{_fwd.3} parent=5 // pred_region
      %s167 = ssub.s32 %s12, 1
      // Predicated region
      $region13: #{_fwd.3} parent=11 // pred_check
        %p168 = pneg %p59
      $region14: #{_fwd.3} parent=11 // pred_check_branch
        %170 = sbr.rel (%p168) target = $region16
      $region15: #{_fwd.3} parent=11 // pred_region
        _
      $region16: #{_fwd.3} parent=11 // pred_fallthru
        _
      // Predicated region
      $region17: #{_fwd.3} parent=11 // pred_check
        %p171 = pneg %p80
      $region18: #{_fwd.3} parent=11 // pred_check_branch
        %173 = sbr.rel (%p171) target = $region20
      $region19: #{_fwd.3} parent=11 // pred_region
        _
      $region20: #{_fwd.3} parent=11 // pred_fallthru
        _
      // Predicated region
      $region21: #{_fwd.3} parent=11 // pred_check
        %p174 = pneg %p101
      $region22: #{_fwd.3} parent=11 // pred_check_branch
        %176 = sbr.rel (%p174) target = $region24
      $region23: #{_fwd.3} parent=11 // pred_region
        _
      $region24: #{_fwd.3} parent=11 // pred_fallthru
        _
    $region12: #{_fwd.3} parent=5 // pred_fallthru
      _
    %p177 = scmp.lt.s32.totalorder %s12, 2
    // Predicated region
    $region25: #{_fwd.3} parent=5 // pred_check
      %p178 = pneg %p177
    $region26: #{_fwd.3} parent=5 // pred_check_branch
      %180 = sbr.rel (%p178) target = $region28
    $region27: #{_fwd.3} parent=5 // pred_region
      // Predicated region
      $region29: #{_fwd.3} parent=27 // pred_check
        %p181 = pneg %p32
      $region30: #{_fwd.3} parent=27 // pred_check_branch
        %183 = sbr.rel (%p181) target = $region32
      $region31: #{_fwd.3} parent=27 // pred_region
        %s184 = smul.u32 4, %s12
        %p185 = scmp.lt.s32.totalorder %s184, 7
        %s186 = scalar_select %p185, %s184, 7
        %s187 = smul.addr %s186, 4
        %s188 = scalar_lea.vmem %s0, %s187
        %s189 = smul.u32 4, %s12
      $region32: #{_fwd.3} parent=27 // pred_fallthru
        _
    $region28: #{_fwd.3} parent=5 // pred_fallthru
      _
    %p190 = scmp.le.s32.totalorder 1, %s12
    %p191 = scmp.lt.s32.totalorder %s12, 3
    %p192 = pnand %p190, %p191
    %p193 = pneg %p192
    // Predicated region
    $region33: #{_fwd.3} parent=5 // pred_check
      _
    $region34: #{_fwd.3} parent=5 // pred_check_branch
      %195 = sbr.rel (%p192) target = $region36
    $region35: #{_fwd.3} parent=5 // pred_region
      %s196 = ssub.s32 %s12, 1
      %s197 = smul.u32 4, %s17
      %p198 = scmp.lt.s32.totalorder %s197, 7
      %s199 = scalar_select %p198, %s197, 7
      %s200 = smul.addr %s199, 4
      %s201 = scalar_lea.vmem %s0, %s200
      %p202 = pneg %p38
      %p203 = pneg %p35
      %p204 = pneg %p59
      %p205 = pneg %p56
      %p206 = pneg %p80
      %p207 = pneg %p77
      %p208 = pneg %p101
      %p209 = pneg %p98
      %p210 = pneg %p127
      %p211 = pneg %p124
      %s212 = smul.u32 4, %s17
      %p213 = scmp.lt.s32.totalorder %s212, 7
      %s214 = scalar_select %p213, %s212, 7
      %s215 = smul.addr %s214, 8
      %s216 = scalar_lea.vmem %s4, %s215
      %p217 = pneg %p153
      %p218 = pneg %p150
      %s219 = smul.u32 4, %s17
      %p220 = scmp.lt.s32.totalorder %s219, 7
      %s221 = scalar_select %p220, %s219, 7
      %s222 = smul.addr %s221, 8
      %s223 = scalar_lea.vmem %s5, %s222
      %s224 = smul.u32 4, %s17
      %p225 = scmp.lt.s32.totalorder %s224, 7
      %s226 = scalar_select %p225, %s224, 7
      %s227 = smul.addr %s226, 4
      %s228 = scalar_lea.vmem %s0, %s227
      %s229 = smul.u32 4, %s17
      %s230 = smul.u32 4, %s17
      %p231 = scmp.lt.s32.totalorder %s230, 7
      %s232 = scalar_select %p231, %s230, 7
      %s233 = smul.addr %s232, 8
      %s234 = scalar_lea.vmem %s4, %s233
      %s235 = smul.u32 4, %s17
      %s236 = smul.u32 4, %s17
      %p237 = scmp.lt.s32.totalorder %s236, 7
      %s238 = scalar_select %p237, %s236, 7
      %s239 = smul.addr %s238, 8
      %s240 = scalar_lea.vmem %s5, %s239
      %s241 = smul.u32 4, %s17
      %v243 = vld [vmem:[%s228] sm:$0xf]
      %v244 = vld [vmem:[%s228 + $0x4] sm:$0xf]
      %v245 = vld [vmem:[%s228 + $0x8] sm:$0xf]
      %v246 = vld [vmem:[%s228 + $0xc] sm:$0xf]
      %v247 = vld [vmem:[%s1] sm:$0xf]
      %v248 = vld [vmem:[%s1 + $0x4] sm:$0xf]
      %v249 = vld [vmem:[%s1 + $0x8] sm:$0xf]
      %v250 = vld [vmem:[%s1 + $0xc] sm:$0xf]
      %v251 = vld [vmem:[%s1 + $0x10] sm:$0xf]
      %v252 = vld [vmem:[%s1 + $0x14] sm:$0xf]
      %v253 = vld [vmem:[%s1 + $0x18] sm:$0xf]
      %v254 = vld [vmem:[%s1 + $0x1c] sm:$0xf]
      %v259 = vunpack.c.l.b16 %v243
      %v260 = vunpack.c.l.b16 %v244
      %v261 = vunpack.c.l.b16 %v245
      %v262 = vunpack.c.l.b16 %v246
      %v263 = vpack.c.b16 %v260, %v259
      %v264 = vpack.c.b16 %v262, %v261
      %v273 = vunpack.c.l.b16 %v247
      %v274 = vunpack.c.l.b16 %v248
      %v275 = vunpack.c.l.b16 %v249
      %v276 = vunpack.c.l.b16 %v250
      %v277 = vunpack.c.l.b16 %v251
      %v278 = vunpack.c.l.b16 %v252
      %v279 = vunpack.c.l.b16 %v253
      %v280 = vunpack.c.l.b16 %v254
      %v281 = vpack.c.b16 %v274, %v273
      %v282 = vpack.c.b16 %v276, %v275
      %v283 = vpack.c.b16 %v278, %v277
      %v284 = vpack.c.b16 %v280, %v279
      %vm289 = vcmask 523264
      %v291 = vsel %vm289, %v263, 0
      %v294 = vsel %vm289, %v264, 0
      %296 = vmatprep.subr.bf16.mxu0 0
      %297 = vmatpush1.bf16.msra.mxu0 %v281
      %298 = vmatprep.subr.bf16.mxu0 0
      %299 = vmatpush1.bf16.msra.mxu0 %v282
      %300 = vmatprep.subr.bf16.mxu0 0
      %301 = vmatpush1.bf16.msra.mxu0 %v283
      %302 = vmatprep.subr.bf16.mxu0 0
      %303 = vmatpush1.bf16.msra.mxu0 %v284
      %304 = vmatprep.subr.bf16.mxu0 0
      %305 = vmatpush1.bf16.msra.mxu0 0
      %306 = vmatprep.subr.bf16.mxu0 0
      %307 = vmatpush1.bf16.msra.mxu0 0
      %308 = vmatprep.subr.bf16.mxu0 0
      %309 = vmatpush1.bf16.msra.mxu0 0
      %310 = vmatprep.subr.bf16.mxu0 0
      %311 = vmatpush1.bf16.msra.mxu0 0
      %312 = vmatprep.subr.bf16.mxu0 0
      %313 = vmatpush1.bf16.msra.mxu0 0
      %314 = vmatprep.subr.bf16.mxu0 0
      %315 = vmatpush1.bf16.msra.mxu0 0
      %316 = vmatprep.subr.bf16.mxu0 0
      %317 = vmatpush1.bf16.msra.mxu0 0
      %318 = vmatprep.subr.bf16.mxu0 0
      %319 = vmatpush1.bf16.msra.mxu0 0
      %320 = vmatprep.subr.bf16.mxu0 0
      %321 = vmatpush1.bf16.msra.mxu0 0
      %322 = vmatprep.subr.bf16.mxu0 0
      %323 = vmatpush1.bf16.msra.mxu0 0
      %324 = vmatprep.subr.bf16.mxu0 0
      %325 = vmatpush1.bf16.msra.mxu0 0
      %326 = vmatprep.subr.bf16.mxu0 0
      %327 = vmatpush1.bf16.msra.mxu0 0
      %328 = vmatprep.mubr.bf16.mxu0 0
      %329 = vmatmul.mubr.bf16.gmra.mrb[0].mxu0 %v291
      %v330 = vpop.f32.mrb[0].mxu0
      %v331 = vadd.f32 0.0, %v330
      %v332 = vpop.f32.mrb[0].mxu0
      %v333 = vpop.f32.mrb[0].mxu0
      %v334 = vadd.f32 0.0, %v333
      %v335 = vpop.f32.mrb[0].mxu0
      %336 = vmatprep.mubr.bf16.mxu0 0
      %337 = vmatmul.mubr.bf16.gmra.mrb[0].mxu0 %v294
      %v338 = vpop.f32.mrb[0].mxu0
      %v339 = vadd.f32 0.0, %v338
      %v340 = vpop.f32.mrb[0].mxu0
      %v341 = vpop.f32.mrb[0].mxu0
      %v342 = vadd.f32 0.0, %v341
      %v343 = vpop.f32.mrb[0].mxu0
      %344 = vdwg.mxu0
      %v345 = vmax.f32 %v331, 0.0
      %v346 = vmax.f32 %v334, 0.0
      %v347 = vmax.f32 %v339, 0.0
      %v348 = vmax.f32 %v342, 0.0
      %349 = vst [vmem:[%s234] sm:$0xff] %v345
      %350 = vst [vmem:[%s234 + $0x8] sm:$0xff] %v346
      %351 = vst [vmem:[%s234 + $0x10] sm:$0xff] %v347
      %352 = vst [vmem:[%s234 + $0x18] sm:$0xff] %v348
      %v353 = vpack.c.bf16 %v346, %v345
      %v354 = vpack.c.bf16 %v348, %v347
      %v355 = vld [vmem:[%s2] sm:$0xf]
      %v356 = vld [vmem:[%s2 + $0x4] sm:$0xf]
      %v357 = vld [vmem:[%s2 + $0x8] sm:$0xf]
      %v358 = vld [vmem:[%s2 + $0xc] sm:$0xf]
      %v359 = vld [vmem:[%s2 + $0x10] sm:$0xf]
      %v360 = vld [vmem:[%s2 + $0x14] sm:$0xf]
      %v361 = vld [vmem:[%s2 + $0x18] sm:$0xf]
      %v362 = vld [vmem:[%s2 + $0x1c] sm:$0xf]
      %v363 = vld [vmem:[%s2 + $0x20] sm:$0xf]
      %v364 = vld [vmem:[%s2 + $0x24] sm:$0xf]
      %v365 = vld [vmem:[%s2 + $0x28] sm:$0xf]
      %v366 = vld [vmem:[%s2 + $0x2c] sm:$0xf]
      %v367 = vld [vmem:[%s2 + $0x30] sm:$0xf]
      %v368 = vld [vmem:[%s2 + $0x34] sm:$0xf]
      %v369 = vld [vmem:[%s2 + $0x38] sm:$0xf]
      %v370 = vld [vmem:[%s2 + $0x3c] sm:$0xf]
      %v371 = vld [vmem:[%s3] sm:$0x1]
      %v373 = vlaneseq
      %v374 = vshrl.u32 %v373, 7
      %v375 = vsub.s32 0, %v374
      %v376 = vrot.slane %v371, %v375
      %v394 = vunpack.c.l.b16 %v355
      %v395 = vunpack.c.l.b16 %v356
      %v396 = vunpack.c.l.b16 %v357
      %v397 = vunpack.c.l.b16 %v358
      %v398 = vunpack.c.l.b16 %v359
      %v399 = vunpack.c.l.b16 %v360
      %v400 = vunpack.c.l.b16 %v361
      %v401 = vunpack.c.l.b16 %v362
      %v402 = vunpack.c.l.b16 %v363
      %v403 = vunpack.c.l.b16 %v364
      %v404 = vunpack.c.l.b16 %v365
      %v405 = vunpack.c.l.b16 %v366
      %v406 = vunpack.c.l.b16 %v367
      %v407 = vunpack.c.l.b16 %v368
      %v408 = vunpack.c.l.b16 %v369
      %v409 = vunpack.c.l.b16 %v370
      %v410 = vpack.c.b16 %v395, %v394
      %v411 = vpack.c.b16 %v397, %v396
      %v412 = vpack.c.b16 %v399, %v398
      %v413 = vpack.c.b16 %v401, %v400
      %v414 = vpack.c.b16 %v403, %v402
      %v415 = vpack.c.b16 %v405, %v404
      %v416 = vpack.c.b16 %v407, %v406
      %v417 = vpack.c.b16 %v409, %v408
      %426 = vmatprep.subr.bf16.mxu0 0
      %427 = vmatpush1.bf16.msra.mxu0 %v410
      %428 = vmatprep.subr.bf16.mxu0 0
      %429 = vmatpush1.bf16.msra.mxu0 %v411
      %430 = vmatprep.subr.bf16.mxu0 0
      %431 = vmatpush1.bf16.msra.mxu0 %v412
      %432 = vmatprep.subr.bf16.mxu0 0
      %433 = vmatpush1.bf16.msra.mxu0 %v413
      %434 = vmatprep.subr.bf16.mxu0 0
      %435 = vmatpush1.bf16.msra.mxu0 %v414
      %436 = vmatprep.subr.bf16.mxu0 0
      %437 = vmatpush1.bf16.msra.mxu0 %v415
      %438 = vmatprep.subr.bf16.mxu0 0
      %439 = vmatpush1.bf16.msra.mxu0 %v416
      %440 = vmatprep.subr.bf16.mxu0 0
      %441 = vmatpush1.bf16.msra.mxu0 %v417
      %442 = vmatprep.subr.bf16.mxu0 0
      %443 = vmatpush1.bf16.msra.mxu0 0
      %444 = vmatprep.subr.bf16.mxu0 0
      %445 = vmatpush1.bf16.msra.mxu0 0
      %446 = vmatprep.subr.bf16.mxu0 0
      %447 = vmatpush1.bf16.msra.mxu0 0
      %448 = vmatprep.subr.bf16.mxu0 0
      %449 = vmatpush1.bf16.msra.mxu0 0
      %450 = vmatprep.subr.bf16.mxu0 0
      %451 = vmatpush1.bf16.msra.mxu0 0
      %452 = vmatprep.subr.bf16.mxu0 0
      %453 = vmatpush1.bf16.msra.mxu0 0
      %454 = vmatprep.subr.bf16.mxu0 0
      %455 = vmatpush1.bf16.msra.mxu0 0
      %456 = vmatprep.subr.bf16.mxu0 0
      %457 = vmatpush1.bf16.msra.mxu0 0
      %458 = vmatprep.mubr.bf16.mxu0 0
      %459 = vmatmul.mubr.bf16.gmra.mrb[0].mxu0 %v353
      %v460 = vpop.f32.mrb[0].mxu0
      %v461 = vadd.f32 %v376, %v460
      %v462 = vpop.f32.mrb[0].mxu0
      %v463 = vpop.f32.mrb[0].mxu0
      %v464 = vadd.f32 %v376, %v463
      %v465 = vpop.f32.mrb[0].mxu0
      %466 = vmatprep.mubr.bf16.mxu0 0
      %467 = vmatmul.mubr.bf16.gmra.mrb[0].mxu0 %v354
      %v468 = vpop.f32.mrb[0].mxu0
      %v469 = vadd.f32 %v376, %v468
      %v470 = vpop.f32.mrb[0].mxu0
      %v471 = vpop.f32.mrb[0].mxu0
      %v472 = vadd.f32 %v376, %v471
      %v473 = vpop.f32.mrb[0].mxu0
      %474 = vdwg.mxu0
      %475 = vst [vmem:[%s240] sm:$0xff] %v461
      %476 = vst [vmem:[%s240 + $0x8] sm:$0xff] %v464
      %477 = vst [vmem:[%s240 + $0x10] sm:$0xff] %v469
      %478 = vst [vmem:[%s240 + $0x18] sm:$0xff] %v472
      %s479 = smul.u32 4, %s17
      %p480 = scmp.lt.s32.totalorder %s479, 7
      %s481 = scalar_select %p480, %s479, 7
      %s482 = smul.addr %s481, 8
      %s483 = scalar_lea.vmem %s4, %s482
      %s484 = smul.u32 4, %s17
      %p485 = scmp.lt.s32.totalorder %s484, 7
      %s486 = scalar_select %p485, %s484, 7
      %s487 = smul.addr %s486, 8
      %s488 = scalar_lea.vmem %s5, %s487
      // Predicated region
      $region37: #{_fwd.3} parent=35 // pred_check
        %p489 = pneg %p124
      $region38: #{_fwd.3} parent=35 // pred_check_branch
        %491 = sbr.rel (%p489) target = $region40
      $region39: #{_fwd.3} parent=35 // pred_region
        %s492 = smul.u32 4, %s17
      $region40: #{_fwd.3} parent=35 // pred_fallthru
        _
      // Predicated region
      $region41: #{_fwd.3} parent=35 // pred_check
        %p493 = pneg %p150
      $region42: #{_fwd.3} parent=35 // pred_check_branch
        %495 = sbr.rel (%p493) target = $region44
      $region43: #{_fwd.3} parent=35 // pred_region
        %s496 = smul.u32 4, %s17
      $region44: #{_fwd.3} parent=35 // pred_fallthru
        _
    $region36: #{_fwd.3} parent=5 // pred_fallthru
      _
    %p497 = scmp.le.s32.totalorder 2, %s12
    // Predicated region
    $region45: #{_fwd.3} parent=5 // pred_check
      %p498 = pneg %p497
    $region46: #{_fwd.3} parent=5 // pred_check_branch
      %500 = sbr.rel (%p498) target = $region48
    $region47: #{_fwd.3} parent=5 // pred_region
      %s501 = ssub.s32 %s12, 2
      // Predicated region
      $region49: #{_fwd.3} parent=47 // pred_check
        %p502 = pneg %p130
      $region50: #{_fwd.3} parent=47 // pred_check_branch
        %504 = sbr.rel (%p502) target = $region52
      $region51: #{_fwd.3} parent=47 // pred_region
        %s505 = smul.u32 4, %s18
        %p506 = scmp.lt.s32.totalorder %s505, 7
        %s507 = scalar_select %p506, %s505, 7
        %s508 = smul.addr %s507, 8
        %s509 = scalar_lea.vmem %s4, %s508
      $region52: #{_fwd.3} parent=47 // pred_fallthru
        _
      // Predicated region
      $region53: #{_fwd.3} parent=47 // pred_check
        %p510 = pneg %p156
      $region54: #{_fwd.3} parent=47 // pred_check_branch
        %512 = sbr.rel (%p510) target = $region56
      $region55: #{_fwd.3} parent=47 // pred_region
        %s513 = smul.u32 4, %s18
        %p514 = scmp.lt.s32.totalorder %s513, 7
        %s515 = scalar_select %p514, %s513, 7
        %s516 = smul.addr %s515, 8
        %s517 = scalar_lea.vmem %s5, %s516
      $region56: #{_fwd.3} parent=47 // pred_fallthru
        _
    $region48: #{_fwd.3} parent=5 // pred_fallthru
      _
  $region6: #{_fwd.3} parent=0 // loop_footer
    %s16 = sadd.s32 1, %s12
  $region7: #{_fwd.3} parent=0 // loop_footer_branch
    %11 = sbr.rel target = $region3
  $region8: #{_fwd.3} parent=0 // loop_exit
    _

</llo_original>
